<compile_context>
chip_gen: v7x
topology: tpu7x:2x2x1
jax: 0.10.0
libtpu: 0.0.40
codegen_flags: <defaults>
</compile_context>

<pallas_src>
import functools

import jax
import jax.numpy as jnp
from jax.experimental import pallas as pl
from jax.experimental.pallas import tpu as pltpu


_LANE = 128
_SUBLANE = 8


def _round_up(x, m):
    return ((x + m - 1) // m) * m


def _pool_classify_kernel(emb_ref, w_ref, b_ref, out_ref, acc_ref, *, inv_s):
    # emb_ref: [tb, ts, H]  native dtype (e.g. bf16)
    # w_ref:   [H, 128]     f32 classifier weight, zero-padded past column 2
    # b_ref:   [1, 128]     f32 bias, zero-padded
    # out_ref: [tb, 128]    f32 logits (lane-dense; sliced to 2 outside)
    # acc_ref: [tb, H]      f32 scratch, persists across the seq grid axis
    s = pl.program_id(1)

    @pl.when(s == 0)
    def _init():
        acc_ref[...] = jnp.zeros_like(acc_ref)

    # Partial sum over this block's seq slice; accumulate in f32.
    acc_ref[...] += jnp.sum(emb_ref[...].astype(jnp.float32), axis=1)

    @pl.when(s == pl.num_programs(1) - 1)
    def _finalize():
        pooled = acc_ref[...] * inv_s                              # mean over seq
        logits = jnp.dot(pooled, w_ref[...],
                         preferred_element_type=jnp.float32)       # MXU, once per batch tile
        out_ref[...] = logits + b_ref[...]


def embedding_difference_head(embeddings, w, b, *, tb=8, ts=128):
    """Mean-pool over seq + 2-way linear classifier, fused in one Pallas kernel.

    embeddings: [B, S, H] (any float dtype; bf16 recommended)
    w:          [H, 2]    classifier weight (already transposed for x @ W^T)
    b:          [2]       classifier bias
    returns:    [B, 2]    f32 logits
    """
    B, S, H = embeddings.shape
    n_out = w.shape[1]

    # ---- tile sizing: (8,128)-aligned last two dims -----------------------
    tb = min(tb, _round_up(B, _SUBLANE))
    ts = min(ts, _round_up(S, _SUBLANE))
    b_pad = _round_up(B, tb)
    s_pad = _round_up(S, ts)

    # Zero-pad batch/seq; padded seq rows add 0 to the sum and we divide by the
    # true S, so the mean is unchanged.
    if (b_pad, s_pad) != (B, S):
        embeddings = jnp.pad(
            embeddings, ((0, b_pad - B), (0, s_pad - S), (0, 0)))

    # Lane-pad the 2-wide classifier to 128 output columns (lane-dense store).
    n_pad = _LANE
    w_p = jnp.zeros((H, n_pad), jnp.float32).at[:, :n_out].set(
        w.astype(jnp.float32))
    b_p = jnp.zeros((1, n_pad), jnp.float32).at[0, :n_out].set(
        b.astype(jnp.float32))

    grid = (b_pad // tb, s_pad // ts)

    # VMEM budget: double-buffered inputs/output + accumulator; cap at 64 MiB
    # (v7x physical VMEM) so the same sizing is safe on v5e/v6e/v7x.
    itemsize = embeddings.dtype.itemsize
    est = 2 * (tb * ts * H * itemsize          # embeddings block (x2 buffers)
               + H * n_pad * 4                 # weight
               + n_pad * 4                     # bias
               + tb * n_pad * 4)               # output block
    est += tb * H * 4                          # f32 accumulator scratch
    vmem_limit = int(min(max(2 * est, 32 * 2 ** 20), 64 * 2 ** 20))

    out = pl.pallas_call(
        functools.partial(_pool_classify_kernel, inv_s=1.0 / S),
        out_shape=jax.ShapeDtypeStruct((b_pad, n_pad), jnp.float32),
        grid_spec=pltpu.PrefetchScalarGridSpec(
            num_scalar_prefetch=0,
            grid=grid,
            in_specs=[
                pl.BlockSpec((tb, ts, H), lambda i, j: (i, j, 0)),   # embeddings
                pl.BlockSpec((H, n_pad), lambda i, j: (0, 0)),       # weight
                pl.BlockSpec((1, n_pad), lambda i, j: (0, 0)),       # bias
            ],
            out_specs=pl.BlockSpec((tb, n_pad), lambda i, j: (i, 0)),
            scratch_shapes=[pltpu.VMEM((tb, H), jnp.float32)],
        ),
        compiler_params=pltpu.CompilerParams(
            dimension_semantics=("parallel", "arbitrary"),
            vmem_limit_bytes=vmem_limit,
        ),
    )(embeddings, w_p, b_p)

    return out[:B, :n_out]


def forward(input_ids, attention_mask, emb_table, w, b):
    # TODO(synk): base_model is a full pretrained transformer; stood in here by
    # a deterministic embedding lookup (attention_mask only feeds base_model —
    # the PyTorch head itself mean-pools over all S positions unmasked).
    del attention_mask
    last_hidden_state = jnp.take(emb_table, input_ids, axis=0)   # [B, S, H] bf16
    return embedding_difference_head(last_hidden_state, w, b)


if __name__ == "__main__":
    key = jax.random.PRNGKey(0)
    k_ids, k_tab, k_w, k_b = jax.random.split(key, 4)

    B, S, H, VOCAB = 8, 16, 128, 100

    input_ids = jax.random.randint(k_ids, (B, S), 0, VOCAB, dtype=jnp.int32)
    attention_mask = jnp.ones((B, S), dtype=jnp.int32)

    # Transformer hidden states are typically bf16; keep the stand-in table bf16.
    emb_table = (jax.random.normal(k_tab, (VOCAB, H), dtype=jnp.float32)
                 * 0.02).astype(jnp.bfloat16)
    # nn.Linear(H, 2): weight [2, H]; store transposed [H, 2] for x @ W^T.
    w = (jax.random.normal(k_w, (2, H), dtype=jnp.float32)
         * (1.0 / jnp.sqrt(H))).T
    b = jax.random.normal(k_b, (2,), dtype=jnp.float32) * 0.01

    logits = forward(input_ids, attention_mask, emb_table, w, b)
    logits = jax.block_until_ready(logits)

    # Pure-JAX reference of the same head.
    hidden = jnp.take(emb_table, input_ids, axis=0).astype(jnp.float32)
    ref = hidden.mean(axis=1) @ w + b
    assert logits.shape == (B, 2)
    assert jnp.allclose(logits, ref, atol=1e-3, rtol=1e-3)

    # Second check: non-(8,128)-aligned B/S exercise the padding path.
    B2, S2 = 2, 12
    ids2 = jax.random.randint(k_ids, (B2, S2), 0, VOCAB, dtype=jnp.int32)
    logits2 = forward(ids2, jnp.ones((B2, S2), jnp.int32), emb_table, w, b)
    logits2 = jax.block_until_ready(logits2)
    hidden2 = jnp.take(emb_table, ids2, axis=0).astype(jnp.float32)
    ref2 = hidden2.mean(axis=1) @ w + b
    assert logits2.shape == (B2, 2)
    assert jnp.allclose(logits2, ref2, atol=1e-3, rtol=1e-3)

    print("KERNEL_OK")
</pallas_src>

<mosaic_0001>
module attributes {stable_mosaic.version = 11 : i64} {
  func.func @_pool_classify_kernel(%arg0: i32, %arg1: i32, %arg2: memref<8x16x128xbf16, #tpu.memory_space<vmem>>, %arg3: memref<128x128xf32, #tpu.memory_space<vmem>>, %arg4: memref<1x128xf32, #tpu.memory_space<vmem>>, %arg5: memref<8x128xf32, #tpu.memory_space<vmem>>, %arg6: memref<8x128xf32, #tpu.memory_space<vmem>>) attributes {dimension_semantics = [#tpu.dimension_semantics<parallel>, #tpu.dimension_semantics<arbitrary>], iteration_bounds = array<i64: 1, 1>, scalar_prefetch = 0 : i64, scratch_operands = 1 : i64, tpu.core_type = #tpu.core_type<tc>, window_params = [{transform_indices = @transform_0, window_bounds = array<i64: 8, 16, 128>}, {pipeline_mode = #tpu.pipeline_mode<synchronous>, transform_indices = @transform_1, window_bounds = array<i64: 128, 128>}, {pipeline_mode = #tpu.pipeline_mode<synchronous>, transform_indices = @transform_2, window_bounds = array<i64: 1, 128>}, {transform_indices = @transform_3, window_bounds = array<i64: 8, 128>}]} {
    %c0_i32 = arith.constant 0 : i32
    %0 = arith.cmpi eq, %arg1, %c0_i32 : i32
    %1 = arith.extui %0 : i1 to i32
    %c0_i32_0 = arith.constant 0 : i32
    %2 = arith.cmpi ne, %1, %c0_i32_0 : i32
    scf.if %2 {
      %cst_9 = arith.constant 0.000000e+00 : f32
      %12 = vector.broadcast %cst_9 : f32 to vector<8x128xf32>
      %c0_10 = arith.constant 0 : index
      %c0_11 = arith.constant 0 : index
      %13 = vector.load %arg6[%c0_10, %c0_11] : memref<8x128xf32, #tpu.memory_space<vmem>>, vector<8x128xf32>
      tpu.vector_store %arg6[%c0_10, %c0_11], %12 {strides = array<i32>} : memref<8x128xf32, #tpu.memory_space<vmem>>, vector<8x128xf32>,
    } else {
    }
    %c0 = arith.constant 0 : index
    %c0_1 = arith.constant 0 : index
    %3 = vector.load %arg6[%c0, %c0_1] : memref<8x128xf32, #tpu.memory_space<vmem>>, vector<8x128xf32>
    %c0_2 = arith.constant 0 : index
    %c0_3 = arith.constant 0 : index
    %c0_4 = arith.constant 0 : index
    %4 = vector.load %arg2[%c0_2, %c0_3, %c0_4] : memref<8x16x128xbf16, #tpu.memory_space<vmem>>, vector<8x16x128xbf16>
    %5 = arith.extf %4 : vector<8x16x128xbf16> to vector<8x16x128xf32>
    %cst = arith.constant dense<0.000000e+00> : vector<8x128xf32>
    %6 = vector.multi_reduction <add>, %5, %cst [1] : vector<8x16x128xf32> to vector<8x128xf32>
    %7 = arith.addf %3, %6 : vector<8x128xf32>
    %c0_5 = arith.constant 0 : index
    %c0_6 = arith.constant 0 : index
    %8 = vector.load %arg6[%c0_5, %c0_6] : memref<8x128xf32, #tpu.memory_space<vmem>>, vector<8x128xf32>
    tpu.vector_store %arg6[%c0_5, %c0_6], %7 {strides = array<i32>} : memref<8x128xf32, #tpu.memory_space<vmem>>, vector<8x128xf32>,
    %c0_i32_7 = arith.constant 0 : i32
    %9 = arith.cmpi eq, %arg1, %c0_i32_7 : i32
    %10 = arith.extui %9 : i1 to i32
    %c0_i32_8 = arith.constant 0 : i32
    %11 = arith.cmpi ne, %10, %c0_i32_8 : i32
    scf.if %11 {
      %c0_9 = arith.constant 0 : index
      %c0_10 = arith.constant 0 : index
      %12 = vector.load %arg6[%c0_9, %c0_10] : memref<8x128xf32, #tpu.memory_space<vmem>>, vector<8x128xf32>
      %cst_11 = arith.constant 6.250000e-02 : f32
      %13 = vector.broadcast %cst_11 : f32 to vector<8x128xf32>
      %14 = arith.mulf %12, %13 : vector<8x128xf32>
      %c0_12 = arith.constant 0 : index
      %c0_13 = arith.constant 0 : index
      %15 = vector.load %arg3[%c0_12, %c0_13] : memref<128x128xf32, #tpu.memory_space<vmem>>, vector<128x128xf32>
      %cst_14 = arith.constant dense<0.000000e+00> : vector<8x128xf32>
      %16 = tpu.matmul %14, %15, %cst_14 {dimension_numbers = #tpu.dot_dimension_numbers<[1], [0], [0], [1], [0, 0, 1, 1], [], []>} : vector<8x128xf32>, vector<128x128xf32>, vector<8x128xf32> -> vector<8x128xf32>
      %c0_15 = arith.constant 0 : index
      %c0_16 = arith.constant 0 : index
      %17 = vector.load %arg4[%c0_15, %c0_16] : memref<1x128xf32, #tpu.memory_space<vmem>>, vector<1x128xf32>
      %18 = vector.broadcast %17 : vector<1x128xf32> to vector<8x128xf32>
      %19 = arith.addf %16, %18 : vector<8x128xf32>
      %c0_17 = arith.constant 0 : index
      %c0_18 = arith.constant 0 : index
      %20 = vector.load %arg5[%c0_17, %c0_18] : memref<8x128xf32, #tpu.memory_space<vmem>>, vector<8x128xf32>
      tpu.vector_store %arg5[%c0_17, %c0_18], %19 {strides = array<i32>} : memref<8x128xf32, #tpu.memory_space<vmem>>, vector<8x128xf32>,
    } else {
    }
    return
  }
  func.func @transform_0(%arg0: i32, %arg1: i32) -> (i32, i32, i32) {
    %c0_i32 = arith.constant 0 : i32
    %c0_i32_0 = arith.constant 0 : i32
    return %arg0, %arg1, %c0_i32 : i32, i32, i32
  }
  func.func @transform_1(%arg0: i32, %arg1: i32) -> (i32, i32) {
    %c0_i32 = arith.constant 0 : i32
    %c0_i32_0 = arith.constant 0 : i32
    %c0_i32_1 = arith.constant 0 : i32
    return %c0_i32, %c0_i32_0 : i32, i32
  }
  func.func @transform_2(%arg0: i32, %arg1: i32) -> (i32, i32) {
    %c0_i32 = arith.constant 0 : i32
    %c0_i32_0 = arith.constant 0 : i32
    %c0_i32_1 = arith.constant 0 : i32
    return %c0_i32, %c0_i32_0 : i32, i32
  }
  func.func @transform_3(%arg0: i32, %arg1: i32) -> (i32, i32) {
    %c0_i32 = arith.constant 0 : i32
    %c0_i32_0 = arith.constant 0 : i32
    return %arg0, %c0_i32 : i32, i32
  }
}

</mosaic_0001>

<llo_original>
// kernel: tpu_custom_call.1
$region0: #{tpu_custom_call.1}
  #allocation0 [shape = 'u32[]', space=smem, size = 0x4, offset = 0x4, fixed_abs, tag = 'smem constant byte address 0x4 - core index']
  #allocation1 [shape = 'u32[144,128]{1,0:T(1,128)}', space=vmem, size = 0x12000, scoped, tag = 'internal scratch']
  #allocation2 [shape = 'f32[8,128]{1,0:T(8,128)}', space=vmem, size = 0x1000, scoped, tag = 'scratch operand']
  %s0 = inlined_call_operand.hbm [shape: bf16[8,16,128], index: 0, kind: input, shape index: {}]
  %s1 = inlined_call_operand.hbm [shape: f32[128,128], index: 1, kind: input, shape index: {}]
  %s2 = inlined_call_operand.vmem [shape: f32[1,128], index: 2, kind: input, shape index: {}]
  %s3 = inlined_call_operand.hbm [shape: f32[8,128], index: 3, kind: output, shape index: {}]
  %s4 = sld [smem:[#allocation0]]
  $region38: #{tpu_custom_call.1} parent=0
    _
  %s6 = ssub.s32 1, %s4
  %s7 = scalar_select 0, %s6, %s4
  $region1: #{tpu_custom_call.1} parent=0
    #allocation3 [shape = 'u8[32768]{0}', space=vmem, size = 0x8000, scoped, tag = 'input window, operand 0, single buffered']
    #allocation4 [shape = 's32[1]{0}', space=sflag, size = 0x4, scoped, tag = 'scoped memory for tpu_custom_call.1']
    #allocation5 [shape = 's32[1]{0}', space=sflag, size = 0x4, scoped, tag = 'scoped memory for tpu_custom_call.1']
    #allocation6 [shape = 'u8[65536]{0}', space=vmem, size = 0x10000, scoped, tag = 'input window, operand 1, single buffered']
    #allocation7 [shape = 's32[1]{0}', space=sflag, size = 0x4, scoped, tag = 'scoped memory for tpu_custom_call.1']
    #allocation8 [shape = 'u8[4096]{0}', space=vmem, size = 0x1000, scoped, tag = 'output window, operand 0, single buffered']
    %8 = vsyncpa [#allocation4], 0
    %9 = vsyncpa [#allocation7], 0
    %10 = vsyncpa [#allocation5], 0
    // Predicated region
    $region2: #{tpu_custom_call.1} parent=1 // pred_check
      _
    $region3: #{tpu_custom_call.1} parent=1 // pred_check_branch
      %12 = sbr.rel (0) target = $region5
    $region4: #{tpu_custom_call.1} parent=1 // pred_region
      %s14 = ssub.s32 1024, 1024
      %15 = vsyncadd [#allocation4], %s14
      %s16 = sshll.u32 [#allocation3], 4
      %s17 = int_to_ptr.vmem [resolvable:$true] %s16
      %22 = dma.hbm_to_vmem [thread:$0]  %s0, 1024, %s17, [#allocation4], 64, 64, 4
    $region5: #{tpu_custom_call.1} parent=1 // pred_fallthru
      _
    // Predicated region
    $region6: #{tpu_custom_call.1} parent=1 // pred_check
      _
    $region7: #{tpu_custom_call.1} parent=1 // pred_check_branch
      %24 = sbr.rel (0) target = $region9
    $region8: #{tpu_custom_call.1} parent=1 // pred_region
      %s26 = ssub.s32 2048, 2048
      %27 = vsyncadd [#allocation7], %s26
      %s28 = sshll.u32 [#allocation6], 4
      %s29 = int_to_ptr.vmem [resolvable:$true] %s28
      %34 = dma.hbm_to_vmem [thread:$0]  %s1, 2048, %s29, [#allocation7], 128, 128, 8
    $region9: #{tpu_custom_call.1} parent=1 // pred_fallthru
      _
    // Predicated region
    $region10: #{tpu_custom_call.1} parent=1 // pred_check
      _
    $region11: #{tpu_custom_call.1} parent=1 // pred_check_branch
      %36 = sbr.rel (0) target = $region13
    $region12: #{tpu_custom_call.1} parent=1 // pred_region
      _
    $region13: #{tpu_custom_call.1} parent=1 // pred_fallthru
      _
    // Predicated region
    $region14: #{tpu_custom_call.1} parent=1 // pred_check
      _
    $region15: #{tpu_custom_call.1} parent=1 // pred_check_branch
      %38 = sbr.rel (0) target = $region17
    $region16: #{tpu_custom_call.1} parent=1 // pred_region
      %39 = dma.done [#allocation4], 1024
    $region17: #{tpu_custom_call.1} parent=1 // pred_fallthru
      _
    // Predicated region
    $region18: #{tpu_custom_call.1} parent=1 // pred_check
      _
    $region19: #{tpu_custom_call.1} parent=1 // pred_check_branch
      %41 = sbr.rel (0) target = $region21
    $region20: #{tpu_custom_call.1} parent=1 // pred_region
      %42 = dma.done [#allocation7], 2048
    $region21: #{tpu_custom_call.1} parent=1 // pred_fallthru
      _
    %p43 = scmp.eq.s32.totalorder 0, 0
    // Predicated region
    $region22: #{tpu_custom_call.1} parent=1 // pred_check
      %p44 = pneg %p43
    $region23: #{tpu_custom_call.1} parent=1 // pred_check_branch
      %46 = sbr.rel (%p44) target = $region25
    $region24: #{tpu_custom_call.1} parent=1 // pred_region
      %47 = vst [vmem:[#allocation2] sm:$0xff] 0.0
    $region25: #{tpu_custom_call.1} parent=1 // pred_fallthru
      _
    %v48 = vld [vmem:[#allocation2] sm:$0xff]
    %v49 = vld [vmem:[#allocation3] sm:$0xf]
    %v50 = vld [vmem:[#allocation3 + $0x4] sm:$0xf]
    %v51 = vld [vmem:[#allocation3 + $0x8] sm:$0xf]
    %v52 = vld [vmem:[#allocation3 + $0xc] sm:$0xf]
    %v53 = vld [vmem:[#allocation3 + $0x10] sm:$0xf]
    %v54 = vld [vmem:[#allocation3 + $0x14] sm:$0xf]
    %v55 = vld [vmem:[#allocation3 + $0x18] sm:$0xf]
    %v56 = vld [vmem:[#allocation3 + $0x1c] sm:$0xf]
    %v57 = vld [vmem:[#allocation3 + $0x20] sm:$0xf]
    %v58 = vld [vmem:[#allocation3 + $0x24] sm:$0xf]
    %v59 = vld [vmem:[#allocation3 + $0x28] sm:$0xf]
    %v60 = vld [vmem:[#allocation3 + $0x2c] sm:$0xf]
    %v61 = vld [vmem:[#allocation3 + $0x30] sm:$0xf]
    %v62 = vld [vmem:[#allocation3 + $0x34] sm:$0xf]
    %v63 = vld [vmem:[#allocation3 + $0x38] sm:$0xf]
    %v64 = vld [vmem:[#allocation3 + $0x3c] sm:$0xf]
    %v65 = vunpack.c.l.bf16 %v49
    %v66 = vunpack.c.l.bf16 %v50
    %v67 = vunpack.c.l.bf16 %v51
    %v68 = vunpack.c.l.bf16 %v52
    %v69 = vunpack.c.l.bf16 %v53
    %v70 = vunpack.c.l.bf16 %v54
    %v71 = vunpack.c.l.bf16 %v55
    %v72 = vunpack.c.l.bf16 %v56
    %v73 = vunpack.c.l.bf16 %v57
    %v74 = vunpack.c.l.bf16 %v58
    %v75 = vunpack.c.l.bf16 %v59
    %v76 = vunpack.c.l.bf16 %v60
    %v77 = vunpack.c.l.bf16 %v61
    %v78 = vunpack.c.l.bf16 %v62
    %v79 = vunpack.c.l.bf16 %v63
    %v80 = vunpack.c.l.bf16 %v64
    %v81 = vadd.f32 %v65, %v66
    %v82 = vrot.slane %v81, 4
    %v83 = vadd.f32 %v81, %v82
    %v84 = vrot.slane %v83, 2
    %v85 = vadd.f32 %v83, %v84
    %v86 = vrot.slane %v85, 1
    %v87 = vadd.f32 %v85, %v86
    %v88 = vadd.f32 %v67, %v68
    %v89 = vrot.slane %v88, 4
    %v90 = vadd.f32 %v88, %v89
    %v91 = vrot.slane %v90, 2
    %v92 = vadd.f32 %v90, %v91
    %v93 = vrot.slane %v92, 1
    %v94 = vadd.f32 %v92, %v93
    %v95 = vadd.f32 %v69, %v70
    %v96 = vrot.slane %v95, 4
    %v97 = vadd.f32 %v95, %v96
    %v98 = vrot.slane %v97, 2
    %v99 = vadd.f32 %v97, %v98
    %v100 = vrot.slane %v99, 1
    %v101 = vadd.f32 %v99, %v100
    %v102 = vadd.f32 %v71, %v72
    %v103 = vrot.slane %v102, 4
    %v104 = vadd.f32 %v102, %v103
    %v105 = vrot.slane %v104, 2
    %v106 = vadd.f32 %v104, %v105
    %v107 = vrot.slane %v106, 1
    %v108 = vadd.f32 %v106, %v107
    %v109 = vadd.f32 %v73, %v74
    %v110 = vrot.slane %v109, 4
    %v111 = vadd.f32 %v109, %v110
    %v112 = vrot.slane %v111, 2
    %v113 = vadd.f32 %v111, %v112
    %v114 = vrot.slane %v113, 1
    %v115 = vadd.f32 %v113, %v114
    %v116 = vadd.f32 %v75, %v76
    %v117 = vrot.slane %v116, 4
    %v118 = vadd.f32 %v116, %v117
    %v119 = vrot.slane %v118, 2
    %v120 = vadd.f32 %v118, %v119
    %v121 = vrot.slane %v120, 1
    %v122 = vadd.f32 %v120, %v121
    %v123 = vadd.f32 %v77, %v78
    %v124 = vrot.slane %v123, 4
    %v125 = vadd.f32 %v123, %v124
    %v126 = vrot.slane %v125, 2
    %v127 = vadd.f32 %v125, %v126
    %v128 = vrot.slane %v127, 1
    %v129 = vadd.f32 %v127, %v128
    %v130 = vadd.f32 %v79, %v80
    %v131 = vrot.slane %v130, 4
    %v132 = vadd.f32 %v130, %v131
    %v133 = vrot.slane %v132, 2
    %v134 = vadd.f32 %v132, %v133
    %v135 = vrot.slane %v134, 1
    %v136 = vadd.f32 %v134, %v135
    %vm145 = vcmask 1041409
    %v146 = vsel %vm145, %v94, %v87
    %vm147 = vcmask 1042434
    %v148 = vsel %vm147, %v101, %v146
    %vm149 = vcmask 1043459
    %v150 = vsel %vm149, %v108, %v148
    %vm151 = vcmask 1044484
    %v152 = vsel %vm151, %v115, %v150
    %vm153 = vcmask 1045509
    %v154 = vsel %vm153, %v122, %v152
    %vm155 = vcmask 1046534
    %v156 = vsel %vm155, %v129, %v154
    %vm157 = vcmask 1047559
    %v158 = vsel %vm157, %v136, %v156
    %v160 = vadd.f32 %v48, %v158
    %161 = vst [vmem:[#allocation2] sm:$0xff] %v160
    // Predicated region
    $region26: #{tpu_custom_call.1} parent=1 // pred_check
      %p162 = pneg %p43
    $region27: #{tpu_custom_call.1} parent=1 // pred_check_branch
      %164 = sbr.rel (%p162) target = $region29
    $region28: #{tpu_custom_call.1} parent=1 // pred_region
      %v165 = vld [vmem:[#allocation2] sm:$0xff]
      %v166 = vmul.f32 %v165, 0.0625
      %v167 = vld [vmem:[#allocation6] sm:$0xff]
      %v168 = vld [vmem:[#allocation6 + $0x8] sm:$0xff]
      %v169 = vld [vmem:[#allocation6 + $0x10] sm:$0xff]
      %v170 = vld [vmem:[#allocation6 + $0x18] sm:$0xff]
      %v171 = vld [vmem:[#allocation6 + $0x20] sm:$0xff]
      %v172 = vld [vmem:[#allocation6 + $0x28] sm:$0xff]
      %v173 = vld [vmem:[#allocation6 + $0x30] sm:$0xff]
      %v174 = vld [vmem:[#allocation6 + $0x38] sm:$0xff]
      %v175 = vld [vmem:[#allocation6 + $0x40] sm:$0xff]
      %v176 = vld [vmem:[#allocation6 + $0x48] sm:$0xff]
      %v177 = vld [vmem:[#allocation6 + $0x50] sm:$0xff]
      %v178 = vld [vmem:[#allocation6 + $0x58] sm:$0xff]
      %v179 = vld [vmem:[#allocation6 + $0x60] sm:$0xff]
      %v180 = vld [vmem:[#allocation6 + $0x68] sm:$0xff]
      %v181 = vld [vmem:[#allocation6 + $0x70] sm:$0xff]
      %v182 = vld [vmem:[#allocation6 + $0x78] sm:$0xff]
      %v183 = vld [vmem:[%s2] sm:$0x1]
      %v185 = vlaneseq
      %v186 = vshrl.u32 %v185, 7
      %v187 = vsub.s32 0, %v186
      %v188 = vrot.slane %v183, %v187
      %190 = vmatprep.subr.mxu0 0.0
      %191 = vmatpush1.msra.mxu0 %v167
      %192 = vmatprep.subr.mxu0 0.0
      %193 = vmatpush1.msra.mxu0 %v168
      %194 = vmatprep.subr.mxu0 0.0
      %195 = vmatpush1.msra.mxu0 %v169
      %196 = vmatprep.subr.mxu0 0.0
      %197 = vmatpush1.msra.mxu0 %v170
      %198 = vmatprep.subr.mxu0 0.0
      %199 = vmatpush1.msra.mxu0 %v171
      %200 = vmatprep.subr.mxu0 0.0
      %201 = vmatpush1.msra.mxu0 %v172
      %202 = vmatprep.subr.mxu0 0.0
      %203 = vmatpush1.msra.mxu0 %v173
      %204 = vmatprep.subr.mxu0 0.0
      %205 = vmatpush1.msra.mxu0 %v174
      %206 = vmatprep.subr.mxu0 0.0
      %207 = vmatpush1.msra.mxu0 %v175
      %208 = vmatprep.subr.mxu0 0.0
      %209 = vmatpush1.msra.mxu0 %v176
      %210 = vmatprep.subr.mxu0 0.0
      %211 = vmatpush1.msra.mxu0 %v177
      %212 = vmatprep.subr.mxu0 0.0
      %213 = vmatpush1.msra.mxu0 %v178
      %214 = vmatprep.subr.mxu0 0.0
      %215 = vmatpush1.msra.mxu0 %v179
      %216 = vmatprep.subr.mxu0 0.0
      %217 = vmatpush1.msra.mxu0 %v180
      %218 = vmatprep.subr.mxu0 0.0
      %219 = vmatpush1.msra.mxu0 %v181
      %220 = vmatprep.subr.mxu0 0.0
      %221 = vmatpush1.msra.mxu0 %v182
      %222 = vmatprep.subr.mxu0 0.0
      %223 = vmatpush1.msra.mxu0 0.0
      %224 = vmatprep.subr.mxu0 0.0
      %225 = vmatpush1.msra.mxu0 0.0
      %226 = vmatprep.subr.mxu0 0.0
      %227 = vmatpush1.msra.mxu0 0.0
      %228 = vmatprep.subr.mxu0 0.0
      %229 = vmatpush1.msra.mxu0 0.0
      %230 = vmatprep.subr.mxu0 0.0
      %231 = vmatpush1.msra.mxu0 0.0
      %232 = vmatprep.subr.mxu0 0.0
      %233 = vmatpush1.msra.mxu0 0.0
      %234 = vmatprep.subr.mxu0 0.0
      %235 = vmatpush1.msra.mxu0 0.0
      %236 = vmatprep.subr.mxu0 0.0
      %237 = vmatpush1.msra.mxu0 0.0
      %238 = vmatprep.subr.mxu0 0.0
      %239 = vmatpush1.msra.mxu0 0.0
      %240 = vmatprep.subr.mxu0 0.0
      %241 = vmatpush1.msra.mxu0 0.0
      %242 = vmatprep.subr.mxu0 0.0
      %243 = vmatpush1.msra.mxu0 0.0
      %244 = vmatprep.subr.mxu0 0.0
      %245 = vmatpush1.msra.mxu0 0.0
      %246 = vmatprep.subr.mxu0 0.0
      %247 = vmatpush1.msra.mxu0 0.0
      %248 = vmatprep.subr.mxu0 0.0
      %249 = vmatpush1.msra.mxu0 0.0
      %250 = vmatprep.subr.mxu0 0.0
      %251 = vmatpush1.msra.mxu0 0.0
      %252 = vmatprep.subr.mxu0 0.0
      %253 = vmatpush1.msra.mxu0 0.0
      %254 = vmatprep.mubr.f32.mxu0 0.0
      %255 = vmatmul.mubr.f32.gmra.mrb[0].mxu0 %v166
      %v256 = vpop.f32.mrb[0].mxu0
      %v257 = vadd.f32 %v188, %v256
      %v258 = vpop.f32.mrb[0].mxu0
      %259 = vdwg.mxu0
      %260 = vst [vmem:[#allocation8] sm:$0xff] %v257
    $region29: #{tpu_custom_call.1} parent=1 // pred_fallthru
      _
    // Predicated region
    $region30: #{tpu_custom_call.1} parent=1 // pred_check
      _
    $region31: #{tpu_custom_call.1} parent=1 // pred_check_branch
      %262 = sbr.rel (0) target = $region33
    $region32: #{tpu_custom_call.1} parent=1 // pred_region
      %s264 = ssub.s32 128, 128
      %265 = vsyncadd [#allocation5], %s264
      %s267 = sshll.u32 [#allocation8], 4
      %s268 = int_to_ptr.vmem [resolvable:$true] %s267
      %270 = dma.vmem_to_hbm [thread:$0]  %s268, 128, %s3, [#allocation5]
    $region33: #{tpu_custom_call.1} parent=1 // pred_fallthru
      _
    // Predicated region
    $region34: #{tpu_custom_call.1} parent=1 // pred_check
      _
    $region35: #{tpu_custom_call.1} parent=1 // pred_check_branch
      %272 = sbr.rel (0) target = $region37
    $region36: #{tpu_custom_call.1} parent=1 // pred_region
      %273 = dma.done [#allocation5], 128
    $region37: #{tpu_custom_call.1} parent=1 // pred_fallthru
      _
    %274 = vsyncpa [#allocation4], 1
    %275 = vsyncpa [#allocation7], 1
    %276 = vsyncpa [#allocation5], 1

</llo_original>
